<compile_context>
chip_gen: v7x
topology: tpu7x:2x2x1
jax: 0.10.0
libtpu: 0.0.40
codegen_flags: <defaults>
</compile_context>

<pallas_src>
import math

import jax
import jax.numpy as jnp
from jax.experimental import pallas as pl
from jax.experimental.pallas import tpu as pltpu

EPS = 1e-5  # torch.nn.LayerNorm default


def _fused_dsconv_kernel(x_ref, mask_ref, gamma_ref, beta_ref, dww_ref, pww_ref,
                         pwb_ref, o_ref):
    """Grid = (batch tiles, repeat). One invocation = one repeat on one batch tile.

    o_ref doubles as the cross-repeat activation carry (same block index for every r).
    Parameter refs hold the full stacked arrays (VMEM-resident) and are indexed by r.
    """
    r = pl.program_id(1)

    bt, Lp, C = x_ref.shape
    n = bt * Lp
    K = dww_ref.shape[1]
    pad = K // 2

    # Seed the VMEM-resident running activation from the input on the first repeat.
    @pl.when(r == 0)
    def _():
        o_ref[...] = x_ref[...]

    x = o_ref[...].reshape(n, C)                 # residual / running activation (f32)

    gamma = gamma_ref[r]                         # (1, C)
    beta = beta_ref[r]                           # (1, C)
    dw = dww_ref[r]                              # (K, C); dw[k, c] == torch w[c, 0, k]
    pw_w = pww_ref[r]                            # (C, C)
    pw_b = pwb_ref[r]                            # (1, C)

    # ---- LayerNorm over channels (two-pass, torch-style) ----
    inv_c = 1.0 / C
    mean = jnp.sum(x, axis=-1, keepdims=True) * inv_c
    xc = x - mean
    var = jnp.sum(xc * xc, axis=-1, keepdims=True) * inv_c
    ln = xc * jax.lax.rsqrt(var + EPS) * gamma + beta

    # TODO(synk): F.dropout branches are training-only; eval (identity) semantics here.

    # ---- Depthwise Conv1d along the sequence axis ----
    # Row j of the flattened (bt*Lp, C) view is position j % Lp of batch j // Lp.
    # Shifts via XLU roll; host-precomputed 0/1 masks implement 'same' zero padding at
    # the *real* sequence boundaries (and block any cross-sequence / padding leakage).
    acc = ln * dw[pad, :]                        # centre tap (d == 0)
    midx = 0
    for k in range(K):                           # static, small K
        d = k - pad
        if d == 0:
            continue
        shifted = pltpu.roll(ln, (-d) % n, 0)    # row j <- ln row (j + d) mod n
        acc = acc + shifted * mask_ref[midx] * dw[k, :]
        midx += 1

    # ---- Pointwise (1x1) Conv1d == MXU matmul over channels + bias, ReLU, residual ----
    out = jnp.dot(acc, pw_w, precision=jax.lax.Precision.DEFAULT,
                  preferred_element_type=jnp.float32)
    new = jnp.maximum(out + pw_b, 0.0) + x

    o_ref[...] = new.reshape(bt, Lp, C).astype(o_ref.dtype)


def _device_kind():
    try:
        return jax.devices()[0].device_kind.lower()
    except Exception:
        return ""


def repeated_dsconv(x, gammas, betas, dw_ws, pw_ws, pw_bs, *, block_b=None,
                    tile_budget_bytes=None):
    """Apply all `repeat` DepthwiseSeparableConv blocks in one fused pallas_call.

    Stacked parameter shapes:
      gammas, betas, pw_bs : (R, 1, C)
      dw_ws                : (R, K, C)   [dw_ws[i, k, c] == torch depthwise.weight[c, 0, k]]
      pw_ws                : (R, C, C)   [pw_ws[i] == torch pointwise.weight[:, :, 0].T]
    """
    B, L, C = x.shape
    R, K, _ = dw_ws.shape
    assert K % 2 == 1, "kernel_size must be odd for 'same'-length padding semantics"
    pad = K // 2

    is_v7 = "v7" in _device_kind()

    # Pad L to a sublane multiple so the in-kernel (bt, L, C) <-> (bt*L, C) reshapes are
    # layout no-ops; masks below encode the *real* L, so padded positions never leak.
    Lp = ((L + 7) // 8) * 8
    row_bytes = Lp * C * 4

    if tile_budget_bytes is None:
        # ~5 MiB activation blocks on v7x (64 MiB VMEM), ~8 MiB on v5e/v6e (128 MiB).
        tile_budget_bytes = (5 << 20) if is_v7 else (8 << 20)

    if block_b is None:
        block_b = max(1, tile_budget_bytes // row_bytes)
        if B >= 2:
            block_b = min(block_b, max(1, B // 2))   # keep nb >= 2 (v7x megacore)
        block_b = min(block_b, B)
    nb = pl.cdiv(B, block_b)
    Bp = nb * block_b

    xp = x
    if (Bp, Lp) != (B, L):
        xp = jnp.pad(x, ((0, Bp - B), (0, Lp - L), (0, 0)))

    n = block_b * Lp

    # Host-precomputed depthwise boundary masks: one 0/1 column per non-centre tap
    # (contribution valid iff the source position pos+d lies in [0, real L)).
    # Identical for every batch tile and repeat -> tiny, VMEM-resident.
    pos = jnp.arange(Lp, dtype=jnp.int32)
    mrows = []
    for k in range(K):
        d = k - pad
        if d == 0:
            continue
        src = pos + d
        mrows.append(((src >= 0) & (src < L)).astype(jnp.float32))
    if mrows:
        masks = jnp.tile(jnp.stack(mrows), (1, block_b))[:, :, None]   # (K-1, n, 1)
    else:
        masks = jnp.ones((1, n, 1), jnp.float32)

    act_spec = pl.BlockSpec((block_b, Lp, C), lambda b, r: (b, 0, 0))

    def full_spec(arr):   # whole array VMEM-resident; constant index -> DMA'd once
        nd = arr.ndim
        return pl.BlockSpec(tuple(arr.shape), lambda b, r, _nd=nd: (0,) * _nd)

    block_bytes = block_b * row_bytes
    param_bytes = 4 * R * (C * C + K * C + 3 * C) + 4 * int(masks.size)
    # ~10x block: 2x in + 2x out double-buffers + ~5 simultaneously-live temporaries.
    vmem_need = 10 * block_bytes + 2 * param_bytes + (4 << 20)
    vmem_cap = (56 << 20) if is_v7 else (100 << 20)
    vmem_limit = int(min(vmem_cap, max(32 << 20, vmem_need)))

    flops = int(R * Bp * Lp * (2 * C * C + 2 * K * C + 10 * C))
    bytes_accessed = int((2 * Bp * Lp * C + R * (C * C + K * C + 3 * C)) * 4)

    out = pl.pallas_call(
        _fused_dsconv_kernel,
        out_shape=jax.ShapeDtypeStruct(xp.shape, x.dtype),
        grid_spec=pltpu.PrefetchScalarGridSpec(
            num_scalar_prefetch=0,
            grid=(nb, R),
            in_specs=[act_spec, full_spec(masks), full_spec(gammas),
                      full_spec(betas), full_spec(dw_ws), full_spec(pw_ws),
                      full_spec(pw_bs)],
            out_specs=act_spec),
        compiler_params=pltpu.CompilerParams(
            dimension_semantics=("parallel", "arbitrary"),
            vmem_limit_bytes=vmem_limit),
        cost_estimate=pl.CostEstimate(
            flops=flops, transcendentals=int(R * Bp * Lp),
            bytes_accessed=bytes_accessed),
    )(xp, masks, gammas, betas, dw_ws, pw_ws, pw_bs)

    if (Bp, Lp) != (B, L):
        out = out[:B, :L, :]
    return out


def init_params(key, repeat, channels, kernel_size):
    """Deterministic init mirroring the PyTorch module's parameter shapes (stacked over R)."""
    gammas = jnp.ones((repeat, 1, channels), jnp.float32)
    betas = jnp.zeros((repeat, 1, channels), jnp.float32)
    bound_dw = 1.0 / math.sqrt(kernel_size)   # fan_in = (C/groups)*K = K
    bound_pw = 1.0 / math.sqrt(channels)      # fan_in = C*1
    dw_ws, pw_ws, pw_bs = [], [], []
    for _ in range(repeat):
        key, k1, k2, k3 = jax.random.split(key, 4)
        dw_ws.append(jax.random.uniform(k1, (kernel_size, channels), jnp.float32,
                                        -bound_dw, bound_dw))
        pw_ws.append(jax.random.uniform(k2, (channels, channels), jnp.float32,
                                        -bound_pw, bound_pw))
        pw_bs.append(jax.random.uniform(k3, (1, channels), jnp.float32,
                                        -bound_pw, bound_pw))
    return gammas, betas, jnp.stack(dw_ws), jnp.stack(pw_ws), jnp.stack(pw_bs)


def _ref_forward(x, gammas, betas, dw_ws, pw_ws, pw_bs):
    """Pure-JAX reference (eval mode), two-pass LayerNorm like torch.nn.LayerNorm."""
    out = x
    R, K, _ = dw_ws.shape
    pad = K // 2
    L = x.shape[1]
    for i in range(R):
        res = out
        mean = out.mean(-1, keepdims=True)
        var = ((out - mean) ** 2).mean(-1, keepdims=True)
        ln = (out - mean) / jnp.sqrt(var + EPS) * gammas[i] + betas[i]
        ln_pad = jnp.pad(ln, ((0, 0), (pad, pad), (0, 0)))
        acc = jnp.zeros_like(ln)
        for k in range(K):
            acc = acc + ln_pad[:, k:k + L, :] * dw_ws[i, k]
        o = jnp.maximum(acc @ pw_ws[i] + pw_bs[i], 0.0)
        out = o + res
    return out


if __name__ == "__main__":
    key = jax.random.PRNGKey(0)

    def run_case(B, L, C, K, R, case_key, block_b=None):
        kx, kp = jax.random.split(case_key)
        x = jax.random.normal(kx, (B, L, C), jnp.float32)
        params = init_params(kp, R, C, K)
        out = jax.block_until_ready(repeated_dsconv(x, *params, block_b=block_b))
        ref = _ref_forward(x, *params)
        assert out.shape == x.shape
        err = float(jnp.max(jnp.abs(out - ref)))
        assert jnp.allclose(out, ref, atol=3e-4, rtol=3e-4), \
            f"mismatch vs JAX reference (max abs err {err})"

    k1, k2 = jax.random.split(key)
    # Aligned case: exercises the pipelined batch axis (nb=2) and the
    # output-block-carried repeat axis.
    run_case(B=4, L=16, C=128, K=5, R=3, case_key=k1, block_b=2)
    # Ragged case: odd L (sublane padding) and B not divisible by block_b
    # (batch padding) -> exercises the real-L boundary masks and padding paths.
    run_case(B=3, L=13, C=128, K=7, R=2, case_key=k2)

    print("KERNEL_OK")
</pallas_src>

<mosaic_0001>
module attributes {stable_mosaic.version = 11 : i64} {
  func.func @_fused_dsconv_kernel(%arg0: i32, %arg1: i32, %arg2: memref<2x16x128xf32, #tpu.memory_space<vmem>>, %arg3: memref<4x32x1xf32, #tpu.memory_space<vmem>>, %arg4: memref<3x1x128xf32, #tpu.memory_space<vmem>>, %arg5: memref<3x1x128xf32, #tpu.memory_space<vmem>>, %arg6: memref<3x5x128xf32, #tpu.memory_space<vmem>>, %arg7: memref<3x128x128xf32, #tpu.memory_space<vmem>>, %arg8: memref<3x1x128xf32, #tpu.memory_space<vmem>>, %arg9: memref<2x16x128xf32, #tpu.memory_space<vmem>>) attributes {dimension_semantics = [#tpu.dimension_semantics<parallel>, #tpu.dimension_semantics<arbitrary>], iteration_bounds = array<i64: 2, 3>, scalar_prefetch = 0 : i64, scratch_operands = 0 : i64, tpu.core_type = #tpu.core_type<tc>, window_params = [{transform_indices = @transform_0, window_bounds = array<i64: 2, 16, 128>}, {pipeline_mode = #tpu.pipeline_mode<synchronous>, transform_indices = @transform_1, window_bounds = array<i64: 4, 32, 1>}, {pipeline_mode = #tpu.pipeline_mode<synchronous>, transform_indices = @transform_2, window_bounds = array<i64: 3, 1, 128>}, {pipeline_mode = #tpu.pipeline_mode<synchronous>, transform_indices = @transform_3, window_bounds = array<i64: 3, 1, 128>}, {pipeline_mode = #tpu.pipeline_mode<synchronous>, transform_indices = @transform_4, window_bounds = array<i64: 3, 5, 128>}, {pipeline_mode = #tpu.pipeline_mode<synchronous>, transform_indices = @transform_5, window_bounds = array<i64: 3, 128, 128>}, {pipeline_mode = #tpu.pipeline_mode<synchronous>, transform_indices = @transform_6, window_bounds = array<i64: 3, 1, 128>}, {transform_indices = @transform_7, window_bounds = array<i64: 2, 16, 128>}]} {
    %c0_i32 = arith.constant 0 : i32
    %0 = arith.cmpi eq, %arg1, %c0_i32 : i32
    %1 = arith.extui %0 : i1 to i32
    %c0_i32_0 = arith.constant 0 : i32
    %2 = arith.cmpi ne, %1, %c0_i32_0 : i32
    scf.if %2 {
      %c0_31 = arith.constant 0 : index
      %c0_32 = arith.constant 0 : index
      %c0_33 = arith.constant 0 : index
      %97 = vector.load %arg2[%c0_31, %c0_32, %c0_33] : memref<2x16x128xf32, #tpu.memory_space<vmem>>, vector<2x16x128xf32>
      %c0_34 = arith.constant 0 : index
      %c0_35 = arith.constant 0 : index
      %c0_36 = arith.constant 0 : index
      %98 = vector.load %arg9[%c0_34, %c0_35, %c0_36] : memref<2x16x128xf32, #tpu.memory_space<vmem>>, vector<2x16x128xf32>
      tpu.vector_store %arg9[%c0_34, %c0_35, %c0_36], %97 {strides = array<i32>} : memref<2x16x128xf32, #tpu.memory_space<vmem>>, vector<2x16x128xf32>,
    } else {
    }
    %c0 = arith.constant 0 : index
    %c0_1 = arith.constant 0 : index
    %c0_2 = arith.constant 0 : index
    %3 = vector.load %arg9[%c0, %c0_1, %c0_2] : memref<2x16x128xf32, #tpu.memory_space<vmem>>, vector<2x16x128xf32>
    %4 = vector.shape_cast %3 : vector<2x16x128xf32> to vector<32x128xf32>
    %5 = arith.index_cast %arg1 : i32 to index
    %c0_3 = arith.constant 0 : index
    %c0_4 = arith.constant 0 : index
    %6 = vector.load %arg4[%5, %c0_3, %c0_4] : memref<3x1x128xf32, #tpu.memory_space<vmem>>, vector<1x1x128xf32>
    %7 = vector.shape_cast %6 : vector<1x1x128xf32> to vector<1x128xf32>
    %8 = arith.index_cast %arg1 : i32 to index
    %c0_5 = arith.constant 0 : index
    %c0_6 = arith.constant 0 : index
    %9 = vector.load %arg5[%8, %c0_5, %c0_6] : memref<3x1x128xf32, #tpu.memory_space<vmem>>, vector<1x1x128xf32>
    %10 = vector.shape_cast %9 : vector<1x1x128xf32> to vector<1x128xf32>
    %11 = arith.index_cast %arg1 : i32 to index
    %c0_7 = arith.constant 0 : index
    %c0_8 = arith.constant 0 : index
    %12 = vector.load %arg6[%11, %c0_7, %c0_8] : memref<3x5x128xf32, #tpu.memory_space<vmem>>, vector<1x5x128xf32>
    %13 = vector.shape_cast %12 : vector<1x5x128xf32> to vector<5x128xf32>
    %14 = arith.index_cast %arg1 : i32 to index
    %c0_9 = arith.constant 0 : index
    %c0_10 = arith.constant 0 : index
    %15 = vector.load %arg7[%14, %c0_9, %c0_10] : memref<3x128x128xf32, #tpu.memory_space<vmem>>, vector<1x128x128xf32>
    %16 = vector.shape_cast %15 : vector<1x128x128xf32> to vector<128x128xf32>
    %17 = arith.index_cast %arg1 : i32 to index
    %c0_11 = arith.constant 0 : index
    %c0_12 = arith.constant 0 : index
    %18 = vector.load %arg8[%17, %c0_11, %c0_12] : memref<3x1x128xf32, #tpu.memory_space<vmem>>, vector<1x1x128xf32>
    %19 = vector.shape_cast %18 : vector<1x1x128xf32> to vector<1x128xf32>
    %cst = arith.constant dense<0.000000e+00> : vector<32xf32>
    %20 = vector.multi_reduction <add>, %4, %cst [1] : vector<32x128xf32> to vector<32xf32>
    %21 = vector.shape_cast %20 : vector<32xf32> to vector<32x1xf32>
    %cst_13 = arith.constant 7.812500e-03 : f32
    %22 = vector.broadcast %cst_13 : f32 to vector<32x1xf32>
    %23 = arith.mulf %21, %22 : vector<32x1xf32>
    %24 = vector.broadcast %23 : vector<32x1xf32> to vector<32x128xf32>
    %25 = arith.subf %4, %24 : vector<32x128xf32>
    %26 = arith.mulf %25, %25 : vector<32x128xf32>
    %cst_14 = arith.constant dense<0.000000e+00> : vector<32xf32>
    %27 = vector.multi_reduction <add>, %26, %cst_14 [1] : vector<32x128xf32> to vector<32xf32>
    %28 = vector.shape_cast %27 : vector<32xf32> to vector<32x1xf32>
    %cst_15 = arith.constant 7.812500e-03 : f32
    %29 = vector.broadcast %cst_15 : f32 to vector<32x1xf32>
    %30 = arith.mulf %28, %29 : vector<32x1xf32>
    %cst_16 = arith.constant 9.99999974E-6 : f32
    %31 = vector.broadcast %cst_16 : f32 to vector<32x1xf32>
    %32 = arith.addf %30, %31 : vector<32x1xf32>
    %33 = math.rsqrt %32 : vector<32x1xf32>
    %34 = vector.broadcast %33 : vector<32x1xf32> to vector<32x128xf32>
    %35 = arith.mulf %25, %34 : vector<32x128xf32>
    %36 = vector.broadcast %7 : vector<1x128xf32> to vector<32x128xf32>
    %37 = arith.mulf %35, %36 : vector<32x128xf32>
    %38 = vector.broadcast %10 : vector<1x128xf32> to vector<32x128xf32>
    %39 = arith.addf %37, %38 : vector<32x128xf32>
    %40 = vector.extract_strided_slice %13 {offsets = [2, 0], sizes = [1, 128], strides = [1, 1]} : vector<5x128xf32> to vector<1x128xf32>
    %41 = vector.shape_cast %40 : vector<1x128xf32> to vector<128xf32>
    %42 = vector.shape_cast %41 : vector<128xf32> to vector<1x128xf32>
    %43 = vector.broadcast %42 : vector<1x128xf32> to vector<32x128xf32>
    %44 = arith.mulf %39, %43 : vector<32x128xf32>
    %c2_i32 = arith.constant 2 : i32
    %45 = tpu.dynamic_rotate %39 by %c2_i32 dim 0 : vector<32x128xf32>, i32 -> vector<32x128xf32>
    %c0_17 = arith.constant 0 : index
    %c0_18 = arith.constant 0 : index
    %c0_19 = arith.constant 0 : index
    %46 = vector.load %arg3[%c0_17, %c0_18, %c0_19] : memref<4x32x1xf32, #tpu.memory_space<vmem>>, vector<1x32x1xf32>
    %47 = vector.shape_cast %46 : vector<1x32x1xf32> to vector<32x1xf32>
    %48 = vector.broadcast %47 : vector<32x1xf32> to vector<32x128xf32>
    %49 = arith.mulf %45, %48 : vector<32x128xf32>
    %50 = vector.extract_strided_slice %13 {offsets = [0, 0], sizes = [1, 128], strides = [1, 1]} : vector<5x128xf32> to vector<1x128xf32>
    %51 = vector.shape_cast %50 : vector<1x128xf32> to vector<128xf32>
    %52 = vector.shape_cast %51 : vector<128xf32> to vector<1x128xf32>
    %53 = vector.broadcast %52 : vector<1x128xf32> to vector<32x128xf32>
    %54 = arith.mulf %49, %53 : vector<32x128xf32>
    %55 = arith.addf %44, %54 : vector<32x128xf32>
    %c1_i32 = arith.constant 1 : i32
    %56 = tpu.dynamic_rotate %39 by %c1_i32 dim 0 : vector<32x128xf32>, i32 -> vector<32x128xf32>
    %c1 = arith.constant 1 : index
    %c0_20 = arith.constant 0 : index
    %c0_21 = arith.constant 0 : index
    %57 = vector.load %arg3[%c1, %c0_20, %c0_21] : memref<4x32x1xf32, #tpu.memory_space<vmem>>, vector<1x32x1xf32>
    %58 = vector.shape_cast %57 : vector<1x32x1xf32> to vector<32x1xf32>
    %59 = vector.broadcast %58 : vector<32x1xf32> to vector<32x128xf32>
    %60 = arith.mulf %56, %59 : vector<32x128xf32>
    %61 = vector.extract_strided_slice %13 {offsets = [1, 0], sizes = [1, 128], strides = [1, 1]} : vector<5x128xf32> to vector<1x128xf32>
    %62 = vector.shape_cast %61 : vector<1x128xf32> to vector<128xf32>
    %63 = vector.shape_cast %62 : vector<128xf32> to vector<1x128xf32>
    %64 = vector.broadcast %63 : vector<1x128xf32> to vector<32x128xf32>
    %65 = arith.mulf %60, %64 : vector<32x128xf32>
    %66 = arith.addf %55, %65 : vector<32x128xf32>
    %c31_i32 = arith.constant 31 : i32
    %67 = tpu.dynamic_rotate %39 by %c31_i32 dim 0 : vector<32x128xf32>, i32 -> vector<32x128xf32>
    %c2 = arith.constant 2 : index
    %c0_22 = arith.constant 0 : index
    %c0_23 = arith.constant 0 : index
    %68 = vector.load %arg3[%c2, %c0_22, %c0_23] : memref<4x32x1xf32, #tpu.memory_space<vmem>>, vector<1x32x1xf32>
    %69 = vector.shape_cast %68 : vector<1x32x1xf32> to vector<32x1xf32>
    %70 = vector.broadcast %69 : vector<32x1xf32> to vector<32x128xf32>
    %71 = arith.mulf %67, %70 : vector<32x128xf32>
    %72 = vector.extract_strided_slice %13 {offsets = [3, 0], sizes = [1, 128], strides = [1, 1]} : vector<5x128xf32> to vector<1x128xf32>
    %73 = vector.shape_cast %72 : vector<1x128xf32> to vector<128xf32>
    %74 = vector.shape_cast %73 : vector<128xf32> to vector<1x128xf32>
    %75 = vector.broadcast %74 : vector<1x128xf32> to vector<32x128xf32>
    %76 = arith.mulf %71, %75 : vector<32x128xf32>
    %77 = arith.addf %66, %76 : vector<32x128xf32>
    %c30_i32 = arith.constant 30 : i32
    %78 = tpu.dynamic_rotate %39 by %c30_i32 dim 0 : vector<32x128xf32>, i32 -> vector<32x128xf32>
    %c3 = arith.constant 3 : index
    %c0_24 = arith.constant 0 : index
    %c0_25 = arith.constant 0 : index
    %79 = vector.load %arg3[%c3, %c0_24, %c0_25] : memref<4x32x1xf32, #tpu.memory_space<vmem>>, vector<1x32x1xf32>
    %80 = vector.shape_cast %79 : vector<1x32x1xf32> to vector<32x1xf32>
    %81 = vector.broadcast %80 : vector<32x1xf32> to vector<32x128xf32>
    %82 = arith.mulf %78, %81 : vector<32x128xf32>
    %83 = vector.extract_strided_slice %13 {offsets = [4, 0], sizes = [1, 128], strides = [1, 1]} : vector<5x128xf32> to vector<1x128xf32>
    %84 = vector.shape_cast %83 : vector<1x128xf32> to vector<128xf32>
    %85 = vector.shape_cast %84 : vector<128xf32> to vector<1x128xf32>
    %86 = vector.broadcast %85 : vector<1x128xf32> to vector<32x128xf32>
    %87 = arith.mulf %82, %86 : vector<32x128xf32>
    %88 = arith.addf %77, %87 : vector<32x128xf32>
    %cst_26 = arith.constant dense<0.000000e+00> : vector<32x128xf32>
    %89 = tpu.matmul %88, %16, %cst_26 {dimension_numbers = #tpu.dot_dimension_numbers<[1], [0], [0], [1], [0, 0, 1, 1], [], []>} : vector<32x128xf32>, vector<128x128xf32>, vector<32x128xf32> -> vector<32x128xf32>
    %90 = vector.broadcast %19 : vector<1x128xf32> to vector<32x128xf32>
    %91 = arith.addf %89, %90 : vector<32x128xf32>
    %cst_27 = arith.constant 0.000000e+00 : f32
    %92 = vector.broadcast %cst_27 : f32 to vector<32x128xf32>
    %93 = arith.maximumf %91, %92 : vector<32x128xf32>
    %94 = arith.addf %93, %4 : vector<32x128xf32>
    %95 = vector.shape_cast %94 : vector<32x128xf32> to vector<2x16x128xf32>
    %c0_28 = arith.constant 0 : index
    %c0_29 = arith.constant 0 : index
    %c0_30 = arith.constant 0 : index
    %96 = vector.load %arg9[%c0_28, %c0_29, %c0_30] : memref<2x16x128xf32, #tpu.memory_space<vmem>>, vector<2x16x128xf32>
    tpu.vector_store %arg9[%c0_28, %c0_29, %c0_30], %95 {strides = array<i32>} : memref<2x16x128xf32, #tpu.memory_space<vmem>>, vector<2x16x128xf32>,
    return
  }
  func.func @transform_0(%arg0: i32, %arg1: i32) -> (i32, i32, i32) {
    %c0_i32 = arith.constant 0 : i32
    %c0_i32_0 = arith.constant 0 : i32
    %c0_i32_1 = arith.constant 0 : i32
    return %arg0, %c0_i32, %c0_i32_0 : i32, i32, i32
  }
  func.func @transform_1(%arg0: i32, %arg1: i32) -> (i32, i32, i32) {
    %c0_i32 = arith.constant 0 : i32
    %c0_i32_0 = arith.constant 0 : i32
    %c0_i32_1 = arith.constant 0 : i32
    %c0_i32_2 = arith.constant 0 : i32
    return %c0_i32, %c0_i32_0, %c0_i32_1 : i32, i32, i32
  }
  func.func @transform_2(%arg0: i32, %arg1: i32) -> (i32, i32, i32) {
    %c0_i32 = arith.constant 0 : i32
    %c0_i32_0 = arith.constant 0 : i32
    %c0_i32_1 = arith.constant 0 : i32
    %c0_i32_2 = arith.constant 0 : i32
    return %c0_i32, %c0_i32_0, %c0_i32_1 : i32, i32, i32
  }
  func.func @transform_3(%arg0: i32, %arg1: i32) -> (i32, i32, i32) {
    %c0_i32 = arith.constant 0 : i32
    %c0_i32_0 = arith.constant 0 : i32
    %c0_i32_1 = arith.constant 0 : i32
    %c0_i32_2 = arith.constant 0 : i32
    return %c0_i32, %c0_i32_0, %c0_i32_1 : i32, i32, i32
  }
  func.func @transform_4(%arg0: i32, %arg1: i32) -> (i32, i32, i32) {
    %c0_i32 = arith.constant 0 : i32
    %c0_i32_0 = arith.constant 0 : i32
    %c0_i32_1 = arith.constant 0 : i32
    %c0_i32_2 = arith.constant 0 : i32
    return %c0_i32, %c0_i32_0, %c0_i32_1 : i32, i32, i32
  }
  func.func @transform_5(%arg0: i32, %arg1: i32) -> (i32, i32, i32) {
    %c0_i32 = arith.constant 0 : i32
    %c0_i32_0 = arith.constant 0 : i32
    %c0_i32_1 = arith.constant 0 : i32
    %c0_i32_2 = arith.constant 0 : i32
    return %c0_i32, %c0_i32_0, %c0_i32_1 : i32, i32, i32
  }
  func.func @transform_6(%arg0: i32, %arg1: i32) -> (i32, i32, i32) {
    %c0_i32 = arith.constant 0 : i32
    %c0_i32_0 = arith.constant 0 : i32
    %c0_i32_1 = arith.constant 0 : i32
    %c0_i32_2 = arith.constant 0 : i32
    return %c0_i32, %c0_i32_0, %c0_i32_1 : i32, i32, i32
  }
  func.func @transform_7(%arg0: i32, %arg1: i32) -> (i32, i32, i32) {
    %c0_i32 = arith.constant 0 : i32
    %c0_i32_0 = arith.constant 0 : i32
    %c0_i32_1 = arith.constant 0 : i32
    return %arg0, %c0_i32, %c0_i32_0 : i32, i32, i32
  }
}

</mosaic_0001>

<llo_original>
// kernel: tpu_custom_call.1
$region0: #{tpu_custom_call.1}
  #allocation0 [shape = 'u32[]', space=smem, size = 0x4, offset = 0x4, fixed_abs, tag = 'smem constant byte address 0x4 - core index']
  #allocation1 [shape = 'u32[144,128]{1,0:T(1,128)}', space=vmem, size = 0x12000, scoped, tag = 'internal scratch']
  %s0 = inlined_call_operand.vmem [shape: f32[4,16,128], index: 0, kind: input, shape index: {}]
  %s1 = inlined_call_operand.vmem [shape: f32[4,32,1], index: 1, kind: input, shape index: {}]
  %s2 = inlined_call_operand.vmem [shape: f32[3,1,128], index: 2, kind: input, shape index: {}]
  %s3 = inlined_call_operand.vmem [shape: f32[3,1,128], index: 3, kind: input, shape index: {}]
  %s4 = inlined_call_operand.vmem [shape: f32[3,5,128], index: 4, kind: input, shape index: {}]
  %s5 = inlined_call_operand.hbm [shape: f32[3,128,128], index: 5, kind: input, shape index: {}]
  %s6 = inlined_call_operand.vmem [shape: f32[3,1,128], index: 6, kind: input, shape index: {}]
  %s7 = inlined_call_operand.hbm [shape: f32[4,16,128], index: 7, kind: output, shape index: {}]
  %s8 = sld [smem:[#allocation0]]
  $region69: #{tpu_custom_call.1} parent=0
    _
  %s10 = ssub.s32 1, %s8
  %s11 = scalar_select 0, %s10, %s8
  $region1: #{tpu_custom_call.1} parent=0
    #allocation2 [shape = 'u8[196608]{0}', space=vmem, size = 0x30000, scoped, tag = 'input window, operand 5, single buffered']
    #allocation3 [shape = 's32[2]{0}', space=sflag, size = 0x8, scoped, tag = 'scoped memory for tpu_custom_call.1']
    #allocation4 [shape = 's32[2]{0}', space=sflag, size = 0x8, scoped, tag = 'scoped memory for tpu_custom_call.1']
    #allocation5 [shape = 'u8[32768]{0}', space=vmem, size = 0x8000, scoped, tag = 'output window, operand 0']
    %12 = vsyncpa [#allocation3], 0
    %13 = vsyncpa [#allocation4], 0
    %s14 = scalar_lea.sflag [#allocation4], 1
    %15 = vsyncpa %s14, 0
    loop: start=0, step=1, limit=8
    $region2: #{tpu_custom_call.1} parent=1 // loop_pre_header
      _
    $region3: #{tpu_custom_call.1} parent=1 // loop_header
      %s17 = sphi 0, %s21
      %p18 = scmp.ge.s32.totalorder %s17, 8
      %s24 = sphi 0, %s36
      %s25 = sphi 0, %s32
      %s26 = sphi 0, %s24
      %s27 = sphi 0, %s25
      %s28 = sphi 0, %s26
      %s29 = sphi 0, %s27
      %s39 = sphi 0, %s41
      %s42 = sphi 0, %s39
      %s43 = sphi 0, %s42
      %s59 = sphi 0, %s43
      %s63 = sphi 0, %s63
      %s65 = sphi 0, %s63
      %s66 = sphi 0, %s65
      %s80 = sphi 0, %s66
      %s84 = sphi 0, %s84
      %s86 = sphi 0, %s84
      %s87 = sphi 0, %s86
      %s101 = sphi 0, %s87
      %s105 = sphi 0, %s105
      %s107 = sphi 0, %s105
      %s108 = sphi 0, %s107
      %s122 = sphi 0, %s108
      %s126 = sphi 0, %s126
      %s128 = sphi 0, %s126
      %s129 = sphi 0, %s128
      %s143 = sphi 0, %s129
      %s147 = sphi 0, %s147
      %s149 = sphi 0, %s147
      %s150 = sphi 0, %s149
      %s164 = sphi 0, %s150
      %s168 = sphi 0, %s168
      %s170 = sphi 0, %s168
      %s171 = sphi 0, %s170
      %s185 = sphi 0, %s171
      %s191 = sphi 0, %s193
      %s194 = sphi 0, %s191
      %s195 = sphi 0, %s194
      %s211 = sphi 0, %s195
    $region4: #{tpu_custom_call.1} parent=1 // loop_header_branch
      %20 = sbr.rel (%p18) target = $region8
    $region5: #{tpu_custom_call.1} parent=1 // loop_body
      %s22 = ssub.s32 %s17, 1
      %s23 = ssub.s32 %s17, 2
      %s30 = sadd.s32 1, %s25
      %p31 = scmp.ge.s32.totalorder %s30, 3
      %s32 = scalar_select %p31, 0, %s30
      %s33 = sadd.s32 1, %s24
      %s34 = scalar_select %p31, %s33, %s24
      %p35 = scmp.ge.s32.totalorder %s34, 2
      %s36 = scalar_select %p35, 0, %s34
      %s37 = ssub.s32 %s24, %s36
      %p38 = scmp.eq.s32.totalorder %s37, 0
      %s40 = sadd.s32 %s39, 1
      %s41 = scalar_select %p38, %s39, %s40
      %p44 = pneg %p38
      %p45 = scmp.eq.s32.totalorder %s17, 5
      %p46 = por %p44, %p45
      %p47 = scmp.ne.s32.totalorder %s39, %s42
      %p48 = scmp.eq.s32.totalorder %s17, 0
      %p49 = por %p47, %p48
      %p50 = scmp.ne.s32.totalorder %s39, %s42
      %p51 = scmp.eq.s32.totalorder %s22, 5
      %p52 = por %p50, %p51
      %p53 = scmp.ne.s32.totalorder %s42, %s43
      %p54 = scmp.eq.s32.totalorder %s22, 0
      %p55 = por %p53, %p54
      %p56 = scmp.ne.s32.totalorder %s42, %s43
      %p57 = scmp.eq.s32.totalorder %s23, 5
      %p58 = por %p56, %p57
      %p60 = scmp.ne.s32.totalorder %s43, %s59
      %p61 = scmp.eq.s32.totalorder %s23, 0
      %p62 = por %p60, %p61
      %s64 = sadd.s32 %s63, 1
      %p67 = scmp.eq.s32.totalorder %s17, 5
      %p68 = scmp.ne.s32.totalorder %s63, %s65
      %p69 = scmp.eq.s32.totalorder %s17, 0
      %p70 = por %p68, %p69
      %p71 = scmp.ne.s32.totalorder %s63, %s65
      %p72 = scmp.eq.s32.totalorder %s22, 5
      %p73 = por %p71, %p72
      %p74 = scmp.ne.s32.totalorder %s65, %s66
      %p75 = scmp.eq.s32.totalorder %s22, 0
      %p76 = por %p74, %p75
      %p77 = scmp.ne.s32.totalorder %s65, %s66
      %p78 = scmp.eq.s32.totalorder %s23, 5
      %p79 = por %p77, %p78
      %p81 = scmp.ne.s32.totalorder %s66, %s80
      %p82 = scmp.eq.s32.totalorder %s23, 0
      %p83 = por %p81, %p82
      %s85 = sadd.s32 %s84, 1
      %p88 = scmp.eq.s32.totalorder %s17, 5
      %p89 = scmp.ne.s32.totalorder %s84, %s86
      %p90 = scmp.eq.s32.totalorder %s17, 0
      %p91 = por %p89, %p90
      %p92 = scmp.ne.s32.totalorder %s84, %s86
      %p93 = scmp.eq.s32.totalorder %s22, 5
      %p94 = por %p92, %p93
      %p95 = scmp.ne.s32.totalorder %s86, %s87
      %p96 = scmp.eq.s32.totalorder %s22, 0
      %p97 = por %p95, %p96
      %p98 = scmp.ne.s32.totalorder %s86, %s87
      %p99 = scmp.eq.s32.totalorder %s23, 5
      %p100 = por %p98, %p99
      %p102 = scmp.ne.s32.totalorder %s87, %s101
      %p103 = scmp.eq.s32.totalorder %s23, 0
      %p104 = por %p102, %p103
      %s106 = sadd.s32 %s105, 1
      %p109 = scmp.eq.s32.totalorder %s17, 5
      %p110 = scmp.ne.s32.totalorder %s105, %s107
      %p111 = scmp.eq.s32.totalorder %s17, 0
      %p112 = por %p110, %p111
      %p113 = scmp.ne.s32.totalorder %s105, %s107
      %p114 = scmp.eq.s32.totalorder %s22, 5
      %p115 = por %p113, %p114
      %p116 = scmp.ne.s32.totalorder %s107, %s108
      %p117 = scmp.eq.s32.totalorder %s22, 0
      %p118 = por %p116, %p117
      %p119 = scmp.ne.s32.totalorder %s107, %s108
      %p120 = scmp.eq.s32.totalorder %s23, 5
      %p121 = por %p119, %p120
      %p123 = scmp.ne.s32.totalorder %s108, %s122
      %p124 = scmp.eq.s32.totalorder %s23, 0
      %p125 = por %p123, %p124
      %s127 = sadd.s32 %s126, 1
      %p130 = scmp.eq.s32.totalorder %s17, 5
      %p131 = scmp.ne.s32.totalorder %s126, %s128
      %p132 = scmp.eq.s32.totalorder %s17, 0
      %p133 = por %p131, %p132
      %p134 = scmp.ne.s32.totalorder %s126, %s128
      %p135 = scmp.eq.s32.totalorder %s22, 5
      %p136 = por %p134, %p135
      %p137 = scmp.ne.s32.totalorder %s128, %s129
      %p138 = scmp.eq.s32.totalorder %s22, 0
      %p139 = por %p137, %p138
      %p140 = scmp.ne.s32.totalorder %s128, %s129
      %p141 = scmp.eq.s32.totalorder %s23, 5
      %p142 = por %p140, %p141
      %p144 = scmp.ne.s32.totalorder %s129, %s143
      %p145 = scmp.eq.s32.totalorder %s23, 0
      %p146 = por %p144, %p145
      %s148 = sadd.s32 %s147, 1
      %p151 = scmp.eq.s32.totalorder %s17, 5
      %p152 = scmp.ne.s32.totalorder %s147, %s149
      %p153 = scmp.eq.s32.totalorder %s17, 0
      %p154 = por %p152, %p153
      %p155 = scmp.ne.s32.totalorder %s147, %s149
      %p156 = scmp.eq.s32.totalorder %s22, 5
      %p157 = por %p155, %p156
      %p158 = scmp.ne.s32.totalorder %s149, %s150
      %p159 = scmp.eq.s32.totalorder %s22, 0
      %p160 = por %p158, %p159
      %p161 = scmp.ne.s32.totalorder %s149, %s150
      %p162 = scmp.eq.s32.totalorder %s23, 5
      %p163 = por %p161, %p162
      %p165 = scmp.ne.s32.totalorder %s150, %s164
      %p166 = scmp.eq.s32.totalorder %s23, 0
      %p167 = por %p165, %p166
      %s169 = sadd.s32 %s168, 1
      %p172 = scmp.eq.s32.totalorder %s17, 5
      %p173 = scmp.ne.s32.totalorder %s168, %s170
      %p174 = scmp.eq.s32.totalorder %s17, 0
      %p175 = por %p173, %p174
      %p176 = scmp.ne.s32.totalorder %s168, %s170
      %p177 = scmp.eq.s32.totalorder %s22, 5
      %p178 = por %p176, %p177
      %p179 = scmp.ne.s32.totalorder %s170, %s171
      %p180 = scmp.eq.s32.totalorder %s22, 0
      %p181 = por %p179, %p180
      %p182 = scmp.ne.s32.totalorder %s170, %s171
      %p183 = scmp.eq.s32.totalorder %s23, 5
      %p184 = por %p182, %p183
      %p186 = scmp.ne.s32.totalorder %s171, %s185
      %p187 = scmp.eq.s32.totalorder %s23, 0
      %p188 = por %p186, %p187
      %s189 = ssub.s32 %s24, %s36
      %p190 = scmp.eq.s32.totalorder %s189, 0
      %s192 = sadd.s32 %s191, 1
      %s193 = scalar_select %p190, %s191, %s192
      %p196 = pneg %p190
      %p197 = scmp.eq.s32.totalorder %s17, 5
      %p198 = por %p196, %p197
      %p199 = scmp.ne.s32.totalorder %s191, %s194
      %p200 = scmp.eq.s32.totalorder %s17, 0
      %p201 = por %p199, %p200
      %p202 = scmp.ne.s32.totalorder %s191, %s194
      %p203 = scmp.eq.s32.totalorder %s22, 5
      %p204 = por %p202, %p203
      %p205 = scmp.ne.s32.totalorder %s194, %s195
      %p206 = scmp.eq.s32.totalorder %s22, 0
      %p207 = por %p205, %p206
      %p208 = scmp.ne.s32.totalorder %s194, %s195
      %p209 = scmp.eq.s32.totalorder %s23, 5
      %p210 = por %p208, %p209
      %p212 = scmp.ne.s32.totalorder %s195, %s211
      %p213 = scmp.eq.s32.totalorder %s23, 0
      %p214 = por %p212, %p213
      %p215 = scmp.le.s32.totalorder 1, %s17
      %p216 = scmp.lt.s32.totalorder %s17, 7
      %p217 = pnand %p215, %p216
      %p218 = pneg %p217
      // Predicated region
      $region9: #{tpu_custom_call.1} parent=5 // pred_check
        _
      $region10: #{tpu_custom_call.1} parent=5 // pred_check_branch
        %220 = sbr.rel (%p217) target = $region12
      $region11: #{tpu_custom_call.1} parent=5 // pred_region
        %s221 = ssub.s32 %s17, 1
        // Predicated region
        $region13: #{tpu_custom_call.1} parent=11 // pred_check
          %p222 = pneg %p76
        $region14: #{tpu_custom_call.1} parent=11 // pred_check_branch
          %224 = sbr.rel (%p222) target = $region16
        $region15: #{tpu_custom_call.1} parent=11 // pred_region
          _
        $region16: #{tpu_custom_call.1} parent=11 // pred_fallthru
          _
        // Predicated region
        $region17: #{tpu_custom_call.1} parent=11 // pred_check
          %p225 = pneg %p97
        $region18: #{tpu_custom_call.1} parent=11 // pred_check_branch
          %227 = sbr.rel (%p225) target = $region20
        $region19: #{tpu_custom_call.1} parent=11 // pred_region
          _
        $region20: #{tpu_custom_call.1} parent=11 // pred_fallthru
          _
        // Predicated region
        $region21: #{tpu_custom_call.1} parent=11 // pred_check
          %p228 = pneg %p118
        $region22: #{tpu_custom_call.1} parent=11 // pred_check_branch
          %230 = sbr.rel (%p228) target = $region24
        $region23: #{tpu_custom_call.1} parent=11 // pred_region
          _
        $region24: #{tpu_custom_call.1} parent=11 // pred_fallthru
          _
        // Predicated region
        $region25: #{tpu_custom_call.1} parent=11 // pred_check
          %p231 = pneg %p139
        $region26: #{tpu_custom_call.1} parent=11 // pred_check_branch
          %233 = sbr.rel (%p231) target = $region28
        $region27: #{tpu_custom_call.1} parent=11 // pred_region
          _
        $region28: #{tpu_custom_call.1} parent=11 // pred_fallthru
          _
        // Predicated region
        $region29: #{tpu_custom_call.1} parent=11 // pred_check
          %p234 = pneg %p160
        $region30: #{tpu_custom_call.1} parent=11 // pred_check_branch
          %236 = sbr.rel (%p234) target = $region32
        $region31: #{tpu_custom_call.1} parent=11 // pred_region
          %s238 = ssub.s32 6144, 6144
          %239 = vsyncadd [#allocation3], %s238
          %s240 = sshll.u32 [#allocation2], 4
          %s241 = int_to_ptr.vmem [resolvable:$true] %s240
          %246 = dma.hbm_to_vmem [thread:$0]  %s5, 6144, %s241, [#allocation3], 128, 128, 8
        $region32: #{tpu_custom_call.1} parent=11 // pred_fallthru
          _
        // Predicated region
        $region33: #{tpu_custom_call.1} parent=11 // pred_check
          %p247 = pneg %p181
        $region34: #{tpu_custom_call.1} parent=11 // pred_check_branch
          %249 = sbr.rel (%p247) target = $region36
        $region35: #{tpu_custom_call.1} parent=11 // pred_region
          _
        $region36: #{tpu_custom_call.1} parent=11 // pred_fallthru
          _
      $region12: #{tpu_custom_call.1} parent=5 // pred_fallthru
        _
      %p250 = scmp.lt.s32.totalorder %s17, 6
      // Predicated region
      $region37: #{tpu_custom_call.1} parent=5 // pred_check
        %p251 = pneg %p250
      $region38: #{tpu_custom_call.1} parent=5 // pred_check_branch
        %253 = sbr.rel (%p251) target = $region40
      $region39: #{tpu_custom_call.1} parent=5 // pred_region
        // Predicated region
        $region41: #{tpu_custom_call.1} parent=39 // pred_check
          %p254 = pneg %p49
        $region42: #{tpu_custom_call.1} parent=39 // pred_check_branch
          %256 = sbr.rel (%p254) target = $region44
        $region43: #{tpu_custom_call.1} parent=39 // pred_region
          %s257 = smul.u32 2, %s24
          %p258 = scmp.lt.s32.totalorder %s257, 3
          %s259 = scalar_select %p258, %s257, 3
          %s260 = smul.addr %s259, 2
          %s261 = smul.addr %s260, 8
          %s262 = scalar_lea.vmem %s0, %s261
          %s263 = smul.u32 2, %s24
        $region44: #{tpu_custom_call.1} parent=39 // pred_fallthru
          _
      $region40: #{tpu_custom_call.1} parent=5 // pred_fallthru
        _
      %p264 = scmp.le.s32.totalorder 1, %s17
      %p265 = scmp.lt.s32.totalorder %s17, 7
      %p266 = pnand %p264, %p265
      %p267 = pneg %p266
      // Predicated region
      $region45: #{tpu_custom_call.1} parent=5 // pred_check
        _
      $region46: #{tpu_custom_call.1} parent=5 // pred_check_branch
        %269 = sbr.rel (%p266) target = $region48
      $region47: #{tpu_custom_call.1} parent=5 // pred_region
        %s270 = ssub.s32 %s17, 1
        // Predicated region
        $region49: #{tpu_custom_call.1} parent=47 // pred_check
          %p271 = pneg %p160
        $region50: #{tpu_custom_call.1} parent=47 // pred_check_branch
          %273 = sbr.rel (%p271) target = $region52
        $region51: #{tpu_custom_call.1} parent=47 // pred_region
          %274 = dma.done [#allocation3], 6144
        $region52: #{tpu_custom_call.1} parent=47 // pred_fallthru
          _
        %s275 = smul.u32 2, %s26
        %p276 = scmp.lt.s32.totalorder %s275, 3
        %s277 = scalar_select %p276, %s275, 3
        %s278 = smul.addr %s277, 2
        %s279 = smul.addr %s278, 8
        %s280 = scalar_lea.vmem %s0, %s279
        %p281 = pneg %p55
        %p282 = pneg %p52
        %p283 = pneg %p76
        %p284 = pneg %p73
        %p285 = pneg %p97
        %p286 = pneg %p94
        %p287 = pneg %p118
        %p288 = pneg %p115
        %p289 = pneg %p139
        %p290 = pneg %p136
        %p291 = pneg %p160
        %p292 = pneg %p157
        %p293 = pneg %p181
        %p294 = pneg %p178
        %p295 = pneg %p207
        %p296 = pneg %p204
        %s297 = sand.u32 %s194, 1
        %s298 = scalar_lea.sflag [#allocation4], %s297
        %s299 = sand.u32 %s194, 1
        %s300 = smul.addr %s299, 32
        %s301 = scalar_lea.vmem [#allocation5], %s300
        %s302 = smul.u32 2, %s26
        %p303 = scmp.lt.s32.totalorder %s302, 3
        %s304 = scalar_select %p303, %s302, 3
        %s305 = smul.addr %s304, 2
        %s306 = smul.addr %s305, 8
        %s307 = scalar_lea.vmem %s0, %s306
        %s308 = smul.u32 2, %s26
        %s309 = smul.u32 2, %s26
        %p310 = scmp.eq.s32.totalorder %s27, 0
        // Predicated region
        $region53: #{tpu_custom_call.1} parent=47 // pred_check
          %p311 = pneg %p310
        $region54: #{tpu_custom_call.1} parent=47 // pred_check_branch
          %313 = sbr.rel (%p311) target = $region56
        $region55: #{tpu_custom_call.1} parent=47 // pred_region
          %v314 = vld [vmem:[%s307] sm:$0xff]
          %v315 = vld [vmem:[%s307 + $0x8] sm:$0xff]
          %v316 = vld [vmem:[%s307 + $0x10] sm:$0xff]
          %v317 = vld [vmem:[%s307 + $0x18] sm:$0xff]
          %318 = vst [vmem:[%s301] sm:$0xff] %v314
          %319 = vst [vmem:[%s301 + $0x8] sm:$0xff] %v315
          %320 = vst [vmem:[%s301 + $0x10] sm:$0xff] %v316
          %321 = vst [vmem:[%s301 + $0x18] sm:$0xff] %v317
        $region56: #{tpu_custom_call.1} parent=47 // pred_fallthru
          _
        %v322 = vld [vmem:[%s301] sm:$0xff]
        %v323 = vld [vmem:[%s301 + $0x8] sm:$0xff]
        %v324 = vld [vmem:[%s301 + $0x10] sm:$0xff]
        %v325 = vld [vmem:[%s301 + $0x18] sm:$0xff]
        %s326 = scalar_lea.vmem %s2, %s27
        %v327 = vld [vmem:[%s326] sm:$0x1]
        %s328 = scalar_lea.vmem %s3, %s27
        %v329 = vld [vmem:[%s328] sm:$0x1]
        %s330 = smul.u32 %s27, 8
        %s331 = scalar_lea.vmem %s4, %s330
        %v332 = vld [vmem:[%s331] sm:$0x1f]
        %s333 = smul.u32 %s27, 128
        %s334 = scalar_lea.vmem [#allocation2], %s333
        %v335 = vld [vmem:[%s334] sm:$0xff]
        %v336 = vld [vmem:[%s334 + $0x8] sm:$0xff]
        %v337 = vld [vmem:[%s334 + $0x10] sm:$0xff]
        %v338 = vld [vmem:[%s334 + $0x18] sm:$0xff]
        %v339 = vld [vmem:[%s334 + $0x20] sm:$0xff]
        %v340 = vld [vmem:[%s334 + $0x28] sm:$0xff]
        %v341 = vld [vmem:[%s334 + $0x30] sm:$0xff]
        %v342 = vld [vmem:[%s334 + $0x38] sm:$0xff]
        %v343 = vld [vmem:[%s334 + $0x40] sm:$0xff]
        %v344 = vld [vmem:[%s334 + $0x48] sm:$0xff]
        %v345 = vld [vmem:[%s334 + $0x50] sm:$0xff]
        %v346 = vld [vmem:[%s334 + $0x58] sm:$0xff]
        %v347 = vld [vmem:[%s334 + $0x60] sm:$0xff]
        %v348 = vld [vmem:[%s334 + $0x68] sm:$0xff]
        %v349 = vld [vmem:[%s334 + $0x70] sm:$0xff]
        %v350 = vld [vmem:[%s334 + $0x78] sm:$0xff]
        %s351 = scalar_lea.vmem %s6, %s27
        %v352 = vld [vmem:[%s351] sm:$0x1]
        %353 = vadd.xlane.f32.xlu0 %v322
        %v354 = vpop.xlane.xlu0 %353
        %355 = vadd.xlane.f32.xlu0 %v323
        %v356 = vpop.xlane.xlu0 %355
        %357 = vadd.xlane.f32.xlu0 %v324
        %v358 = vpop.xlane.xlu0 %357
        %359 = vadd.xlane.f32.xlu0 %v325
        %v360 = vpop.xlane.xlu0 %359
        %v361 = vmul.f32 %v354, 0.0078125
        %v362 = vmul.f32 %v356, 0.0078125
        %v363 = vmul.f32 %v358, 0.0078125
        %v364 = vmul.f32 %v360, 0.0078125
        %v365 = vsub.f32 %v322, %v361
        %v366 = vsub.f32 %v323, %v362
        %v367 = vsub.f32 %v324, %v363
        %v368 = vsub.f32 %v325, %v364
        %v369 = vmul.f32 %v365, %v365
        %v370 = vmul.f32 %v366, %v366
        %v371 = vmul.f32 %v367, %v367
        %v372 = vmul.f32 %v368, %v368
        %373 = vadd.xlane.f32.xlu0 %v369
        %v374 = vpop.xlane.xlu0 %373
        %375 = vadd.xlane.f32.xlu0 %v370
        %v376 = vpop.xlane.xlu0 %375
        %377 = vadd.xlane.f32.xlu0 %v371
        %v378 = vpop.xlane.xlu0 %377
        %379 = vadd.xlane.f32.xlu0 %v372
        %v380 = vpop.xlane.xlu0 %379
        %v381 = vmul.f32 %v374, 0.0078125
        %v382 = vmul.f32 %v376, 0.0078125
        %v383 = vmul.f32 %v378, 0.0078125
        %v384 = vmul.f32 %v380, 0.0078125
        %v385 = vadd.f32 %v381, 1e-05
        %v386 = vadd.f32 %v382, 1e-05
        %v387 = vadd.f32 %v383, 1e-05
        %v388 = vadd.f32 %v384, 1e-05
        %v389 = vrsqrt.pop %v385
        %v390 = vrsqrt.pop %v386
        %v391 = vrsqrt.pop %v387
        %v392 = vrsqrt.pop %v388
        %v393 = vmul.f32 %v365, %v389
        %v394 = vmul.f32 %v366, %v390
        %v395 = vmul.f32 %v367, %v391
        %v396 = vmul.f32 %v368, %v392
        %v398 = vlaneseq
        %v399 = vshrl.u32 %v398, 7
        %v400 = vsub.s32 0, %v399
        %v401 = vrot.slane %v327, %v400
        %v403 = vmul.f32 %v393, %v401
        %v404 = vmul.f32 %v394, %v401
        %v405 = vmul.f32 %v395, %v401
        %v406 = vmul.f32 %v396, %v401
        %v408 = vlaneseq
        %v409 = vshrl.u32 %v408, 7
        %v410 = vsub.s32 0, %v409
        %v411 = vrot.slane %v329, %v410
        %v413 = vadd.f32 %v403, %v411
        %v414 = vadd.f32 %v404, %v411
        %v415 = vadd.f32 %v405, %v411
        %v416 = vadd.f32 %v406, %v411
        %v417 = vlaneseq
        %v418 = vshrl.u32 %v417, 7
        %v419 = vsub.s32 2, %v418
        %v420 = vrot.slane %v332, %v419
        %v421 = vmul.f32 %v413, %v420
        %v422 = vmul.f32 %v414, %v420
        %v423 = vmul.f32 %v415, %v420
        %v424 = vmul.f32 %v416, %v420
        %v425 = vrot.slane %v413, 6
        %v426 = vrot.slane %v414, 6
        %v427 = vrot.slane %v415, 6
        %v428 = vrot.slane %v416, 6
        %v429 = vlaneseq
        %v430 = vshrl.u32 %v429, 7
        %vm431 = vcmp.lt.s32.totalorder %v430, 2
        %v432 = vsel %vm431, %v427, %v428
        %v433 = vsel %vm431, %v426, %v427
        %v434 = vsel %vm431, %v425, %v426
        %v435 = vsel %vm431, %v428, %v425
        %v436 = vld [vmem:[%s1] sm:$0xff]
        %v437 = vld [vmem:[%s1 + $0x8] sm:$0xff]
        %v438 = vld [vmem:[%s1 + $0x10] sm:$0xff]
        %v439 = vld [vmem:[%s1 + $0x18] sm:$0xff]
        %441 = vset.pattern.permute.xlu0 0
        %442 = vperm.xlu0 %441, %v436
        %v443 = vpop.permute.xlu0 %442
        %446 = vset.pattern.permute.xlu0 0
        %447 = vperm.xlu0 %446, %v437
        %v448 = vpop.permute.xlu0 %447
        %451 = vset.pattern.permute.xlu0 0
        %452 = vperm.xlu0 %451, %v438
        %v453 = vpop.permute.xlu0 %452
        %456 = vset.pattern.permute.xlu0 0
        %457 = vperm.xlu0 %456, %v439
        %v458 = vpop.permute.xlu0 %457
        %v460 = vmul.f32 %v435, %v443
        %v461 = vmul.f32 %v434, %v448
        %v462 = vmul.f32 %v433, %v453
        %v463 = vmul.f32 %v432, %v458
        %v464 = vlaneseq
        %v465 = vshrl.u32 %v464, 7
        %v466 = vsub.s32 0, %v465
        %v467 = vrot.slane %v332, %v466
        %v468 = vmul.f32 %v460, %v467
        %v469 = vmul.f32 %v461, %v467
        %v470 = vmul.f32 %v462, %v467
        %v471 = vmul.f32 %v463, %v467
        %v472 = vadd.f32 %v421, %v468
        %v473 = vadd.f32 %v422, %v469
        %v474 = vadd.f32 %v423, %v470
        %v475 = vadd.f32 %v424, %v471
        %v476 = vrot.slane %v413, 7
        %v477 = vrot.slane %v414, 7
        %v478 = vrot.slane %v415, 7
        %v479 = vrot.slane %v416, 7
        %vm480 = vcmp.lt.s32.totalorder %v430, 1
        %v481 = vsel %vm480, %v478, %v479
        %v482 = vsel %vm480, %v477, %v478
        %v483 = vsel %vm480, %v476, %v477
        %v484 = vsel %vm480, %v479, %v476
        %s485 = scalar_lea.vmem %s1, 32
        %v486 = vld [vmem:[%s485] sm:$0xff]
        %v487 = vld [vmem:[%s485 + $0x8] sm:$0xff]
        %v488 = vld [vmem:[%s485 + $0x10] sm:$0xff]
        %v489 = vld [vmem:[%s485 + $0x18] sm:$0xff]
        %491 = vset.pattern.permute.xlu0 0
        %492 = vperm.xlu0 %491, %v486
        %v493 = vpop.permute.xlu0 %492
        %496 = vset.pattern.permute.xlu0 0
        %497 = vperm.xlu0 %496, %v487
        %v498 = vpop.permute.xlu0 %497
        %501 = vset.pattern.permute.xlu0 0
        %502 = vperm.xlu0 %501, %v488
        %v503 = vpop.permute.xlu0 %502
        %506 = vset.pattern.permute.xlu0 0
        %507 = vperm.xlu0 %506, %v489
        %v508 = vpop.permute.xlu0 %507
        %v510 = vmul.f32 %v484, %v493
        %v511 = vmul.f32 %v483, %v498
        %v512 = vmul.f32 %v482, %v503
        %v513 = vmul.f32 %v481, %v508
        %v514 = vlaneseq
        %v515 = vshrl.u32 %v514, 7
        %v516 = vsub.s32 1, %v515
        %v517 = vrot.slane %v332, %v516
        %v518 = vmul.f32 %v510, %v517
        %v519 = vmul.f32 %v511, %v517
        %v520 = vmul.f32 %v512, %v517
        %v521 = vmul.f32 %v513, %v517
        %v522 = vadd.f32 %v472, %v518
        %v523 = vadd.f32 %v473, %v519
        %v524 = vadd.f32 %v474, %v520
        %v525 = vadd.f32 %v475, %v521
        %v526 = vrot.slane %v413, 1
        %v527 = vrot.slane %v414, 1
        %v528 = vrot.slane %v415, 1
        %v529 = vrot.slane %v416, 1
        %vm530 = vcmp.lt.s32.totalorder %v430, 7
        %v531 = vsel %vm530, %v528, %v529
        %v532 = vsel %vm530, %v527, %v528
        %v533 = vsel %vm530, %v526, %v527
        %v534 = vsel %vm530, %v529, %v526
        %s535 = scalar_lea.vmem %s1, 64
        %v536 = vld [vmem:[%s535] sm:$0xff]
        %v537 = vld [vmem:[%s535 + $0x8] sm:$0xff]
        %v538 = vld [vmem:[%s535 + $0x10] sm:$0xff]
        %v539 = vld [vmem:[%s535 + $0x18] sm:$0xff]
        %541 = vset.pattern.permute.xlu0 0
        %542 = vperm.xlu0 %541, %v536
        %v543 = vpop.permute.xlu0 %542
        %546 = vset.pattern.permute.xlu0 0
        %547 = vperm.xlu0 %546, %v537
        %v548 = vpop.permute.xlu0 %547
        %551 = vset.pattern.permute.xlu0 0
        %552 = vperm.xlu0 %551, %v538
        %v553 = vpop.permute.xlu0 %552
        %556 = vset.pattern.permute.xlu0 0
        %557 = vperm.xlu0 %556, %v539
        %v558 = vpop.permute.xlu0 %557
        %v560 = vmul.f32 %v533, %v543
        %v561 = vmul.f32 %v532, %v548
        %v562 = vmul.f32 %v531, %v553
        %v563 = vmul.f32 %v534, %v558
        %v564 = vlaneseq
        %v565 = vshrl.u32 %v564, 7
        %v566 = vsub.s32 3, %v565
        %v567 = vrot.slane %v332, %v566
        %v568 = vmul.f32 %v560, %v567
        %v569 = vmul.f32 %v561, %v567
        %v570 = vmul.f32 %v562, %v567
        %v571 = vmul.f32 %v563, %v567
        %v572 = vadd.f32 %v522, %v568
        %v573 = vadd.f32 %v523, %v569
        %v574 = vadd.f32 %v524, %v570
        %v575 = vadd.f32 %v525, %v571
        %v576 = vrot.slane %v413, 2
        %v577 = vrot.slane %v414, 2
        %v578 = vrot.slane %v415, 2
        %v579 = vrot.slane %v416, 2
        %vm580 = vcmp.lt.s32.totalorder %v430, 6
        %v581 = vsel %vm580, %v578, %v579
        %v582 = vsel %vm580, %v577, %v578
        %v583 = vsel %vm580, %v576, %v577
        %v584 = vsel %vm580, %v579, %v576
        %s585 = scalar_lea.vmem %s1, 96
        %v586 = vld [vmem:[%s585] sm:$0xff]
        %v587 = vld [vmem:[%s585 + $0x8] sm:$0xff]
        %v588 = vld [vmem:[%s585 + $0x10] sm:$0xff]
        %v589 = vld [vmem:[%s585 + $0x18] sm:$0xff]
        %591 = vset.pattern.permute.xlu0 0
        %592 = vperm.xlu0 %591, %v586
        %v593 = vpop.permute.xlu0 %592
        %596 = vset.pattern.permute.xlu0 0
        %597 = vperm.xlu0 %596, %v587
        %v598 = vpop.permute.xlu0 %597
        %601 = vset.pattern.permute.xlu0 0
        %602 = vperm.xlu0 %601, %v588
        %v603 = vpop.permute.xlu0 %602
        %606 = vset.pattern.permute.xlu0 0
        %607 = vperm.xlu0 %606, %v589
        %v608 = vpop.permute.xlu0 %607
        %v610 = vmul.f32 %v583, %v593
        %v611 = vmul.f32 %v582, %v598
        %v612 = vmul.f32 %v581, %v603
        %v613 = vmul.f32 %v584, %v608
        %v614 = vlaneseq
        %v615 = vshrl.u32 %v614, 7
        %v616 = vsub.s32 4, %v615
        %v617 = vrot.slane %v332, %v616
        %v618 = vmul.f32 %v610, %v617
        %v619 = vmul.f32 %v611, %v617
        %v620 = vmul.f32 %v612, %v617
        %v621 = vmul.f32 %v613, %v617
        %v622 = vadd.f32 %v572, %v618
        %v623 = vadd.f32 %v573, %v619
        %v624 = vadd.f32 %v574, %v620
        %v625 = vadd.f32 %v575, %v621
        %v627 = vlaneseq
        %v628 = vshrl.u32 %v627, 7
        %v629 = vsub.s32 0, %v628
        %v630 = vrot.slane %v352, %v629
        %632 = vmatprep.subr.mxu0 0.0
        %633 = vmatpush1.msra.mxu0 %v335
        %634 = vmatprep.subr.mxu0 0.0
        %635 = vmatpush1.msra.mxu0 %v336
        %636 = vmatprep.subr.mxu0 0.0
        %637 = vmatpush1.msra.mxu0 %v337
        %638 = vmatprep.subr.mxu0 0.0
        %639 = vmatpush1.msra.mxu0 %v338
        %640 = vmatprep.subr.mxu0 0.0
        %641 = vmatpush1.msra.mxu0 %v339
        %642 = vmatprep.subr.mxu0 0.0
        %643 = vmatpush1.msra.mxu0 %v340
        %644 = vmatprep.subr.mxu0 0.0
        %645 = vmatpush1.msra.mxu0 %v341
        %646 = vmatprep.subr.mxu0 0.0
        %647 = vmatpush1.msra.mxu0 %v342
        %648 = vmatprep.subr.mxu0 0.0
        %649 = vmatpush1.msra.mxu0 %v343
        %650 = vmatprep.subr.mxu0 0.0
        %651 = vmatpush1.msra.mxu0 %v344
        %652 = vmatprep.subr.mxu0 0.0
        %653 = vmatpush1.msra.mxu0 %v345
        %654 = vmatprep.subr.mxu0 0.0
        %655 = vmatpush1.msra.mxu0 %v346
        %656 = vmatprep.subr.mxu0 0.0
        %657 = vmatpush1.msra.mxu0 %v347
        %658 = vmatprep.subr.mxu0 0.0
        %659 = vmatpush1.msra.mxu0 %v348
        %660 = vmatprep.subr.mxu0 0.0
        %661 = vmatpush1.msra.mxu0 %v349
        %662 = vmatprep.subr.mxu0 0.0
        %663 = vmatpush1.msra.mxu0 %v350
        %664 = vmatprep.subr.mxu0 0.0
        %665 = vmatpush1.msra.mxu0 0.0
        %666 = vmatprep.subr.mxu0 0.0
        %667 = vmatpush1.msra.mxu0 0.0
        %668 = vmatprep.subr.mxu0 0.0
        %669 = vmatpush1.msra.mxu0 0.0
        %670 = vmatprep.subr.mxu0 0.0
        %671 = vmatpush1.msra.mxu0 0.0
        %672 = vmatprep.subr.mxu0 0.0
        %673 = vmatpush1.msra.mxu0 0.0
        %674 = vmatprep.subr.mxu0 0.0
        %675 = vmatpush1.msra.mxu0 0.0
        %676 = vmatprep.subr.mxu0 0.0
        %677 = vmatpush1.msra.mxu0 0.0
        %678 = vmatprep.subr.mxu0 0.0
        %679 = vmatpush1.msra.mxu0 0.0
        %680 = vmatprep.subr.mxu0 0.0
        %681 = vmatpush1.msra.mxu0 0.0
        %682 = vmatprep.subr.mxu0 0.0
        %683 = vmatpush1.msra.mxu0 0.0
        %684 = vmatprep.subr.mxu0 0.0
        %685 = vmatpush1.msra.mxu0 0.0
        %686 = vmatprep.subr.mxu0 0.0
        %687 = vmatpush1.msra.mxu0 0.0
        %688 = vmatprep.subr.mxu0 0.0
        %689 = vmatpush1.msra.mxu0 0.0
        %690 = vmatprep.subr.mxu0 0.0
        %691 = vmatpush1.msra.mxu0 0.0
        %692 = vmatprep.subr.mxu0 0.0
        %693 = vmatpush1.msra.mxu0 0.0
        %694 = vmatprep.subr.mxu0 0.0
        %695 = vmatpush1.msra.mxu0 0.0
        %696 = vmatprep.mubr.f32.mxu0 0.0
        %697 = vmatmul.mubr.f32.gmra.mrb[0].mxu0 %v622
        %v698 = vpop.f32.mrb[0].mxu0
        %v699 = vadd.f32 %v630, %v698
        %v700 = vpop.f32.mrb[0].mxu0
        %701 = vmatprep.mubr.f32.mxu0 0.0
        %702 = vmatmul.mubr.f32.gmra.mrb[0].mxu0 %v623
        %v703 = vpop.f32.mrb[0].mxu0
        %v704 = vadd.f32 %v630, %v703
        %v705 = vpop.f32.mrb[0].mxu0
        %706 = vmatprep.mubr.f32.mxu0 0.0
        %707 = vmatmul.mubr.f32.gmra.mrb[0].mxu0 %v624
        %v708 = vpop.f32.mrb[0].mxu0
        %v709 = vadd.f32 %v630, %v708
        %v710 = vpop.f32.mrb[0].mxu0
        %711 = vmatprep.mubr.f32.mxu0 0.0
        %712 = vmatmul.mubr.f32.gmra.mrb[0].mxu0 %v625
        %v713 = vpop.f32.mrb[0].mxu0
        %v714 = vadd.f32 %v630, %v713
        %v715 = vpop.f32.mrb[0].mxu0
        %716 = vdwg.mxu0
        %v717 = vmax.f32 %v699, 0.0
        %v718 = vmax.f32 %v704, 0.0
        %v719 = vmax.f32 %v709, 0.0
        %v720 = vmax.f32 %v714, 0.0
        %v721 = vadd.f32 %v717, %v322
        %v722 = vadd.f32 %v718, %v323
        %v723 = vadd.f32 %v719, %v324
        %v724 = vadd.f32 %v720, %v325
        %725 = vst [vmem:[%s301] sm:$0xff] %v721
        %726 = vst [vmem:[%s301 + $0x8] sm:$0xff] %v722
        %727 = vst [vmem:[%s301 + $0x10] sm:$0xff] %v723
        %728 = vst [vmem:[%s301 + $0x18] sm:$0xff] %v724
        %s729 = sand.u32 %s194, 1
        %s730 = scalar_lea.sflag [#allocation4], %s729
        %s731 = sand.u32 %s194, 1
        %s732 = smul.addr %s731, 32
        %s733 = scalar_lea.vmem [#allocation5], %s732
        // Predicated region
        $region57: #{tpu_custom_call.1} parent=47 // pred_check
          %p734 = pneg %p204
        $region58: #{tpu_custom_call.1} parent=47 // pred_check_branch
          %736 = sbr.rel (%p734) target = $region60
        $region59: #{tpu_custom_call.1} parent=47 // pred_region
          %s737 = smul.u32 2, %s26
          %s739 = ssub.s32 512, 512
          %740 = vsyncadd %s730, %s739
          %s741 = smul.addr %s737, 2
          %s742 = smul.addr %s741, 128
          %s743 = scalar_lea.hbm %s7, %s742
          %s744 = sshll.u32 %s733, 4
          %s745 = int_to_ptr.vmem [resolvable:$true] %s744
          %750 = dma.vmem_to_hbm [thread:$0]  %s745, 512, %s743, %s730, 128, 128, 8
        $region60: #{tpu_custom_call.1} parent=47 // pred_fallthru
          _
      $region48: #{tpu_custom_call.1} parent=5 // pred_fallthru
        _
      %p751 = scmp.le.s32.totalorder 2, %s17
      // Predicated region
      $region61: #{tpu_custom_call.1} parent=5 // pred_check
        %p752 = pneg %p751
      $region62: #{tpu_custom_call.1} parent=5 // pred_check_branch
        %754 = sbr.rel (%p752) target = $region64
      $region63: #{tpu_custom_call.1} parent=5 // pred_region
        %s755 = ssub.s32 %s17, 2
        // Predicated region
        $region65: #{tpu_custom_call.1} parent=63 // pred_check
          %p756 = pneg %p210
        $region66: #{tpu_custom_call.1} parent=63 // pred_check_branch
          %758 = sbr.rel (%p756) target = $region68
        $region67: #{tpu_custom_call.1} parent=63 // pred_region
          %s759 = sand.u32 %s195, 1
          %s760 = scalar_lea.sflag [#allocation4], %s759
          %s761 = sand.u32 %s195, 1
          %s762 = smul.addr %s761, 32
          %s763 = scalar_lea.vmem [#allocation5], %s762
          %764 = dma.done %s760, 512
        $region68: #{tpu_custom_call.1} parent=63 // pred_fallthru
          _
      $region64: #{tpu_custom_call.1} parent=5 // pred_fallthru
        _
    $region6: #{tpu_custom_call.1} parent=1 // loop_footer
      %s21 = sadd.s32 1, %s17
    $region7: #{tpu_custom_call.1} parent=1 // loop_footer_branch
      %16 = sbr.rel target = $region3
    $region8: #{tpu_custom_call.1} parent=1 // loop_exit
      _
    %765 = vsyncpa [#allocation3], 1
    %s766 = scalar_lea.sflag [#allocation3], 1
    %767 = vsyncpa %s766, 1
    %768 = vsyncpa [#allocation4], 1
    %s769 = scalar_lea.sflag [#allocation4], 1
    %770 = vsyncpa %s769, 1

</llo_original>
